<compile_context>
chip_gen: v6e
topology: v6e:2x2x1
jax: 0.10.0
libtpu: 0.0.40
codegen_flags: <defaults>
</compile_context>

<pallas_src>
import jax
import jax.numpy as jnp
from jax.experimental import pallas as pl
from jax.experimental.pallas import tpu as pltpu


# ---------------------------------------------------------------------------
# Tiling policy.
# ---------------------------------------------------------------------------
_TM_CAP = 512            # general kernel: batch tile (sublanes), multiple of 8
_TN_CAP = 512            # general kernel: D_out tile (lanes), multiple of 128
_TK_CAP = 2048           # reduction tile (lanes), multiple of 128
_LANE_DOUT_MAX = 128     # D_out <= this -> lane-dense transposed-output kernel
_TM_LANE_MAX = 4096      # lane-dense kernel: hard cap on the batch (lane) tile
_X_BLOCK_BYTES = 8 * 1024 * 1024   # per-block budget for the streamed x operand
# Scoped-VMEM request: worst-case double-buffered footprint here is ~20 MiB,
# comfortably inside 32 MiB on every generation (v7x has only 64 MiB physical
# VMEM per TensorCore, so don't ask for more).
_VMEM_LIMIT = 32 * 1024 * 1024


def _cdiv(a, b):
    return (a + b - 1) // b


def _round_up(x, m):
    return _cdiv(x, m) * m


def _pick_k(d_in, cap):
    """Reduction tile: full-D_in (single K step) whenever it fits the cap."""
    if d_in <= cap:
        return d_in, False                     # no K grid axis, no masking
    return cap, (d_in % cap != 0)              # K tiled; mask the ragged tail


def _pick_sublane_batch_tile(b, cap):
    """Batch tile when batch lives on sublanes (general kernel).

    Split the 'parallel' batch axis into >= 2 blocks whenever possible so both
    of v7x's TensorCores get work; on single-core v5e/v6e the extra grid step
    is ~0.35us and therefore negligible.
    """
    if b <= 8:
        return b                               # equals full dim -> always legal
    return min(cap, _round_up(_cdiv(b, 2), 8))


def _pick_lane_batch_tile(b, cap):
    """Batch tile when batch lives on lanes (transposed-output kernel).

    This tile is the LAST dim of the (D_out, B) output block, so it must be a
    multiple of 128 unless it covers B exactly.
    """
    if b <= 128:
        return b                               # equals full dim -> always legal
    return min(cap, _round_up(_cdiv(b, 2), 128))


# ---------------------------------------------------------------------------
# Kernels.  K is contracted on the LAST dim of both operands, so the PyTorch
# (D_out, D_in) weight layout is consumed as-is (no wrapper-side weight.T).
# ---------------------------------------------------------------------------
def _matmul_nt_kernel(x_ref, w_ref, o_ref):
    """General path, single K step: o[i, j] = x_tile @ w_tile^T."""
    o_ref[...] = jax.lax.dot_general(
        x_ref[...], w_ref[...],
        dimension_numbers=(((1,), (1,)), ((), ())),
        preferred_element_type=jnp.float32,
    ).astype(o_ref.dtype)


def _make_matmul_nt_acc_kernel(d_in, tk, mask_k):
    """General path, K tiled: f32 VMEM accumulator + optional ragged-K mask."""

    def kernel(x_ref, w_ref, o_ref, acc_ref):
        k = pl.program_id(2)

        @pl.when(k == 0)
        def _init():
            acc_ref[...] = jnp.zeros_like(acc_ref)

        x = x_ref[...]
        w = w_ref[...]
        if mask_k:
            # Zero the out-of-bounds K columns of BOTH operands on the ragged
            # tail block (unspecified data must not reach the reduction).
            limit = d_in - k * tk
            x = jnp.where(
                jax.lax.broadcasted_iota(jnp.int32, x.shape, 1) < limit, x, 0)
            w = jnp.where(
                jax.lax.broadcasted_iota(jnp.int32, w.shape, 1) < limit, w, 0)

        acc_ref[...] += jax.lax.dot_general(
            x, w, dimension_numbers=(((1,), (1,)), ((), ())),
            preferred_element_type=jnp.float32)

        @pl.when(k == pl.num_programs(2) - 1)
        def _fin():
            o_ref[...] = acc_ref[...].astype(o_ref.dtype)

    return kernel


def _lane_kernel(x_ref, w_ref, o_ref):
    """Small-D_out path, single K step: o = w_tile @ x_tile^T -> (D_out, tm)
    with the batch on lanes (unmasked full-lane stores even for D_out == 1)."""
    o_ref[...] = jax.lax.dot_general(
        w_ref[...], x_ref[...],
        dimension_numbers=(((1,), (1,)), ((), ())),
        preferred_element_type=jnp.float32,
    ).astype(o_ref.dtype)


def _make_lane_acc_kernel(d_in, tk, mask_k):
    """Small-D_out path, K tiled: accumulator + optional ragged-K mask."""

    def kernel(x_ref, w_ref, o_ref, acc_ref):
        k = pl.program_id(1)

        @pl.when(k == 0)
        def _init():
            acc_ref[...] = jnp.zeros_like(acc_ref)

        x = x_ref[...]
        w = w_ref[...]
        if mask_k:
            limit = d_in - k * tk
            x = jnp.where(
                jax.lax.broadcasted_iota(jnp.int32, x.shape, 1) < limit, x, 0)
            w = jnp.where(
                jax.lax.broadcasted_iota(jnp.int32, w.shape, 1) < limit, w, 0)

        acc_ref[...] += jax.lax.dot_general(
            w, x, dimension_numbers=(((1,), (1,)), ((), ())),
            preferred_element_type=jnp.float32)

        @pl.when(k == pl.num_programs(1) - 1)
        def _fin():
            o_ref[...] = acc_ref[...].astype(o_ref.dtype)

    return kernel


# ---------------------------------------------------------------------------
# Wrappers.
# ---------------------------------------------------------------------------
def _forward_general(x, weight):
    """(B, D_in) @ (D_out, D_in)^T for D_out > _LANE_DOUT_MAX."""
    B, D_in = x.shape
    D_out = weight.shape[0]
    out_dtype = jnp.result_type(x.dtype, weight.dtype)

    tk, mask_k = _pick_k(D_in, _TK_CAP)
    nk = _cdiv(D_in, tk)
    tm = _pick_sublane_batch_tile(B, _TM_CAP)
    ni = _cdiv(B, tm)
    tn = D_out if D_out <= _TN_CAP else _TN_CAP
    nj = _cdiv(D_out, tn)

    # x is re-streamed once per j tile, w once per i tile.
    bytes_accessed = (nj * x.size * x.dtype.itemsize
                      + ni * weight.size * weight.dtype.itemsize
                      + B * D_out * jnp.dtype(out_dtype).itemsize)
    cost = pl.CostEstimate(flops=2 * B * D_out * D_in, transcendentals=0,
                           bytes_accessed=bytes_accessed)

    if nk == 1:
        grid = (ni, nj)
        in_specs = [pl.BlockSpec((tm, tk), lambda i, j: (i, 0)),
                    pl.BlockSpec((tn, tk), lambda i, j: (j, 0))]
        out_spec = pl.BlockSpec((tm, tn), lambda i, j: (i, j))
        scratch = []
        kernel = _matmul_nt_kernel
        dims = ("parallel", "parallel")
    else:
        grid = (ni, nj, nk)
        in_specs = [pl.BlockSpec((tm, tk), lambda i, j, k: (i, k)),
                    pl.BlockSpec((tn, tk), lambda i, j, k: (j, k))]
        out_spec = pl.BlockSpec((tm, tn), lambda i, j, k: (i, j))
        scratch = [pltpu.VMEM((tm, tn), jnp.float32)]
        kernel = _make_matmul_nt_acc_kernel(D_in, tk, mask_k)
        dims = ("parallel", "parallel", "arbitrary")

    return pl.pallas_call(
        kernel,
        out_shape=jax.ShapeDtypeStruct((B, D_out), out_dtype),
        grid_spec=pltpu.PrefetchScalarGridSpec(
            num_scalar_prefetch=0,
            grid=grid,
            in_specs=in_specs,
            out_specs=out_spec,
            scratch_shapes=scratch),
        compiler_params=pltpu.CompilerParams(
            dimension_semantics=dims,
            vmem_limit_bytes=_VMEM_LIMIT),
        cost_estimate=cost,
    )(x, weight)


def _forward_small_dout(x, weight):
    """Lane-dense transposed-output path for D_out <= _LANE_DOUT_MAX.

    Returns the (D_out, B) slab with batch on lanes; the caller transposes /
    squeezes the tiny result.
    """
    B, D_in = x.shape
    D_out = weight.shape[0]
    out_dtype = jnp.result_type(x.dtype, weight.dtype)

    tk, mask_k = _pick_k(D_in, _TK_CAP)
    nk = _cdiv(D_in, tk)

    # Keep each streamed x block at <= _X_BLOCK_BYTES so double buffering stays
    # well inside the scoped-VMEM budget on every generation (incl. v7x).
    elem_budget = _X_BLOCK_BYTES // jnp.dtype(x.dtype).itemsize
    tm_cap = max(128, min(_TM_LANE_MAX, (elem_budget // tk) // 128 * 128))
    tm = _pick_lane_batch_tile(B, tm_cap)
    ni = _cdiv(B, tm)

    bytes_accessed = (x.size * x.dtype.itemsize
                      + ni * weight.size * weight.dtype.itemsize
                      + B * D_out * jnp.dtype(out_dtype).itemsize)
    cost = pl.CostEstimate(flops=2 * B * D_out * D_in, transcendentals=0,
                           bytes_accessed=bytes_accessed)

    if nk == 1:
        grid = (ni,)
        in_specs = [pl.BlockSpec((tm, tk), lambda i: (i, 0)),
                    pl.BlockSpec((D_out, tk), lambda i: (0, 0))]
        out_spec = pl.BlockSpec((D_out, tm), lambda i: (0, i))
        scratch = []
        kernel = _lane_kernel
        dims = ("parallel",)
    else:
        grid = (ni, nk)
        in_specs = [pl.BlockSpec((tm, tk), lambda i, k: (i, k)),
                    pl.BlockSpec((D_out, tk), lambda i, k: (0, k))]
        out_spec = pl.BlockSpec((D_out, tm), lambda i, k: (0, i))
        scratch = [pltpu.VMEM((D_out, tm), jnp.float32)]
        kernel = _make_lane_acc_kernel(D_in, tk, mask_k)
        dims = ("parallel", "arbitrary")

    return pl.pallas_call(
        kernel,
        out_shape=jax.ShapeDtypeStruct((D_out, B), out_dtype),
        grid_spec=pltpu.PrefetchScalarGridSpec(
            num_scalar_prefetch=0,
            grid=grid,
            in_specs=in_specs,
            out_specs=out_spec,
            scratch_shapes=scratch),
        compiler_params=pltpu.CompilerParams(
            dimension_semantics=dims,
            vmem_limit_bytes=_VMEM_LIMIT),
        cost_estimate=cost,
    )(x, weight)


# ---------------------------------------------------------------------------
# Public wrapper: fc(x).squeeze(dim=-1), bias-free.
# ---------------------------------------------------------------------------
def classifier_forward(x, weight):
    """Pallas equivalent of ClassifierNonBias.forward.

    x:      (..., D_in)       f32 or bf16
    weight: (D_out, D_in)     PyTorch nn.Linear layout, bias=False

    bf16 inputs are consumed directly (accumulation stays f32 on the MXU); no
    wrapper-side astype is inserted since that would round-trip x through HBM.
    """
    D_out, D_in = weight.shape
    lead = x.shape[:-1]
    x2 = x.reshape(-1, D_in)

    if D_out <= _LANE_DOUT_MAX:
        yT = _forward_small_dout(x2, weight)          # (D_out, B), batch on lanes
        if D_out == 1:
            return yT[0].reshape(lead)                # fc(x).squeeze(-1)
        return yT.T.reshape(lead + (D_out,))          # tiny transpose in wrapper
    y = _forward_general(x2, weight)                  # (B, D_out)
    return y.reshape(lead + (D_out,))                 # squeeze(-1) is a no-op


def init_linear_weight(key, input_dim, output_dim):
    # nn.Linear default init: U(-1/sqrt(fan_in), 1/sqrt(fan_in)); no bias.
    bound = 1.0 / jnp.sqrt(jnp.float32(input_dim))
    return jax.random.uniform(key, (output_dim, input_dim), jnp.float32,
                              -bound, bound)


def _ref_forward(x, w):
    y = jnp.einsum("...i,oi->...o", x, w, precision=jax.lax.Precision.HIGHEST)
    return y[..., 0] if w.shape[0] == 1 else y


if __name__ == "__main__":
    key = jax.random.PRNGKey(0)
    k_x1, k_x2, k_x4, k_w1, k_w2, k_w3, k_w4 = jax.random.split(key, 7)

    # Case 1: canonical use — output_dim = 1, 3-D input, squeeze(-1) folds away.
    x1 = jax.random.normal(k_x1, (2, 5, 32), jnp.float32)
    w1 = init_linear_weight(k_w1, 32, 1)
    y1 = jax.block_until_ready(classifier_forward(x1, w1))
    assert y1.shape == (2, 5), y1.shape
    assert jnp.allclose(y1, _ref_forward(x1, w1), atol=1e-4, rtol=1e-4)

    # Case 2: small D_out (> 1) — lane-dense transposed-output kernel.
    x2 = jax.random.normal(k_x2, (10, 48), jnp.float32)
    w2 = init_linear_weight(k_w2, 48, 8)
    y2 = jax.block_until_ready(classifier_forward(x2, w2))
    assert y2.shape == (10, 8), y2.shape
    assert jnp.allclose(y2, _ref_forward(x2, w2), atol=1e-4, rtol=1e-4)

    # Case 3: D_out > 128 — general tiled kernel with a ragged batch block.
    w3 = init_linear_weight(k_w3, 48, 160)
    y3 = jax.block_until_ready(classifier_forward(x2, w3))
    assert y3.shape == (10, 160), y3.shape
    assert jnp.allclose(y3, _ref_forward(x2, w3), atol=1e-4, rtol=1e-4)

    # Case 4: D_in > K tile — multi-K accumulator kernel with ragged-K masking.
    x4 = jax.random.normal(k_x4, (16, 2100), jnp.float32)
    w4 = init_linear_weight(k_w4, 2100, 1)
    y4 = jax.block_until_ready(classifier_forward(x4, w4))
    assert y4.shape == (16,), y4.shape
    assert jnp.allclose(y4, _ref_forward(x4, w4), atol=2e-3, rtol=2e-3)

    print("KERNEL_OK")
</pallas_src>

<mosaic_0001>
module attributes {stable_mosaic.version = 11 : i64} {
  func.func @_lane_kernel(%arg0: i32, %arg1: memref<10x32xf32, #tpu.memory_space<vmem>>, %arg2: memref<1x32xf32, #tpu.memory_space<vmem>>, %arg3: memref<1x10xf32, #tpu.memory_space<vmem>>) attributes {dimension_semantics = [#tpu.dimension_semantics<parallel>], iteration_bounds = array<i64: 1>, scalar_prefetch = 0 : i64, scratch_operands = 0 : i64, tpu.core_type = #tpu.core_type<tc>, window_params = [{transform_indices = @transform_0, window_bounds = array<i64: 10, 32>}, {pipeline_mode = #tpu.pipeline_mode<synchronous>, transform_indices = @transform_1, window_bounds = array<i64: 1, 32>}, {transform_indices = @transform_2, window_bounds = array<i64: 1, 10>}]} {
    %c0 = arith.constant 0 : index
    %c0_0 = arith.constant 0 : index
    %0 = vector.load %arg2[%c0, %c0_0] : memref<1x32xf32, #tpu.memory_space<vmem>>, vector<1x32xf32>
    %c0_1 = arith.constant 0 : index
    %c0_2 = arith.constant 0 : index
    %1 = vector.load %arg1[%c0_1, %c0_2] : memref<10x32xf32, #tpu.memory_space<vmem>>, vector<10x32xf32>
    %cst = arith.constant dense<0.000000e+00> : vector<1x10xf32>
    %2 = tpu.matmul %0, %1, %cst {dimension_numbers = #tpu.dot_dimension_numbers<[1], [1], [0], [0], [0, 0, 1, 0], [], []>} : vector<1x32xf32>, vector<10x32xf32>, vector<1x10xf32> -> vector<1x10xf32>
    %c0_3 = arith.constant 0 : index
    %c0_4 = arith.constant 0 : index
    %3 = vector.load %arg3[%c0_3, %c0_4] : memref<1x10xf32, #tpu.memory_space<vmem>>, vector<1x10xf32>
    tpu.vector_store %arg3[%c0_3, %c0_4], %2 {strides = array<i32>} : memref<1x10xf32, #tpu.memory_space<vmem>>, vector<1x10xf32>,
    return
  }
  func.func @transform_0(%arg0: i32) -> (i32, i32) {
    %c0_i32 = arith.constant 0 : i32
    %c0_i32_0 = arith.constant 0 : i32
    return %arg0, %c0_i32 : i32, i32
  }
  func.func @transform_1(%arg0: i32) -> (i32, i32) {
    %c0_i32 = arith.constant 0 : i32
    %c0_i32_0 = arith.constant 0 : i32
    %c0_i32_1 = arith.constant 0 : i32
    return %c0_i32, %c0_i32_0 : i32, i32
  }
  func.func @transform_2(%arg0: i32) -> (i32, i32) {
    %c0_i32 = arith.constant 0 : i32
    %c0_i32_0 = arith.constant 0 : i32
    return %c0_i32, %arg0 : i32, i32
  }
}

</mosaic_0001>

<llo_original>
// kernel: tpu_custom_call.1
$region0: #{tpu_custom_call.1}
  #allocation0 [shape = 'u32[]', space=smem, size = 0x4, offset = 0x4, fixed_abs, tag = 'smem constant byte address 0x4 - core index']
  #allocation1 [shape = 'u32[144,128]{1,0:T(1,128)}', space=vmem, size = 0x12000, scoped, tag = 'internal scratch']
  %s0 = inlined_call_operand.hbm [shape: f32[10,32], index: 0, kind: input, shape index: {}]
  %s1 = inlined_call_operand.vmem [shape: f32[1,32], index: 1, kind: input, shape index: {}]
  %s2 = inlined_call_operand.hbm [shape: f32[1,10], index: 2, kind: output, shape index: {}]
  %s3 = sld [smem:[#allocation0]]
  $region22: #{tpu_custom_call.1} parent=0
    _
  %s5 = ssub.s32 1, %s3
  %s6 = scalar_select 0, %s5, %s3
  $region1: #{tpu_custom_call.1} parent=0
    #allocation2 [shape = 'u8[8192]{0}', space=vmem, size = 0x2000, scoped, tag = 'input window, operand 0, single buffered']
    #allocation3 [shape = 's32[1]{0}', space=sflag, size = 0x4, scoped, tag = 'scoped memory for tpu_custom_call.1']
    #allocation4 [shape = 's32[1]{0}', space=sflag, size = 0x4, scoped, tag = 'scoped memory for tpu_custom_call.1']
    #allocation5 [shape = 'u8[512]{0}', space=vmem, size = 0x400, scoped, tag = 'output window, operand 0, single buffered']
    %7 = vsyncpa [#allocation3], 0
    %8 = vsyncpa [#allocation4], 0
    // Predicated region
    $region2: #{tpu_custom_call.1} parent=1 // pred_check
      _
    $region3: #{tpu_custom_call.1} parent=1 // pred_check_branch
      %10 = sbr.rel (0) target = $region5
    $region4: #{tpu_custom_call.1} parent=1 // pred_region
      %s12 = ssub.s32 256, 256
      %13 = vsyncadd [#allocation3], %s12
      %s14 = sshll.u32 [#allocation2], 4
      %s15 = int_to_ptr.vmem [resolvable:$true] %s14
      %20 = dma.hbm_to_vmem [thread:$0]  %s0, 256, %s15, [#allocation3], 128, 128, 8
    $region5: #{tpu_custom_call.1} parent=1 // pred_fallthru
      _
    // Predicated region
    $region6: #{tpu_custom_call.1} parent=1 // pred_check
      _
    $region7: #{tpu_custom_call.1} parent=1 // pred_check_branch
      %22 = sbr.rel (0) target = $region9
    $region8: #{tpu_custom_call.1} parent=1 // pred_region
      _
    $region9: #{tpu_custom_call.1} parent=1 // pred_fallthru
      _
    // Predicated region
    $region10: #{tpu_custom_call.1} parent=1 // pred_check
      _
    $region11: #{tpu_custom_call.1} parent=1 // pred_check_branch
      %24 = sbr.rel (0) target = $region13
    $region12: #{tpu_custom_call.1} parent=1 // pred_region
      %25 = dma.done [#allocation3], 256
    $region13: #{tpu_custom_call.1} parent=1 // pred_fallthru
      _
    %v26 = vld [vmem:[%s1] sm:$0x1]
    %v27 = vld [vmem:[#allocation2] sm:$0xff]
    %v28 = vld [vmem:[#allocation2 + $0x8] sm:$0x3]
    %vm29 = vcmask 261120
    %v31 = vsel %vm29, %v26, 0
    %v34 = vsel %vm29, %v27, 0
    %v37 = vsel %vm29, %v28, 0
    %39 = vmatprep.subr.mxu0 0.0
    %40 = vmatpush1.xpose.msra.mxu0 0.0
    %41 = vmatprep.subr.mxu0 0.0
    %42 = vmatpush1.xpose.msra.mxu0 0.0
    %43 = vmatprep.subr.mxu0 0.0
    %44 = vmatpush1.xpose.msra.mxu0 0.0
    %45 = vmatprep.subr.mxu0 0.0
    %46 = vmatpush1.xpose.msra.mxu0 0.0
    %47 = vmatprep.subr.mxu0 0.0
    %48 = vmatpush1.xpose.msra.mxu0 0.0
    %49 = vmatprep.subr.mxu0 0.0
    %50 = vmatpush1.xpose.msra.mxu0 0.0
    %51 = vmatprep.subr.mxu0 0.0
    %52 = vmatpush1.xpose.msra.mxu0 0.0
    %53 = vmatprep.subr.mxu0 0.0
    %54 = vmatpush1.xpose.msra.mxu0 0.0
    %55 = vmatprep.subr.mxu0 0.0
    %56 = vmatpush1.xpose.msra.mxu0 0.0
    %57 = vmatprep.subr.mxu0 0.0
    %58 = vmatpush1.xpose.msra.mxu0 0.0
    %59 = vmatprep.subr.mxu0 0.0
    %60 = vmatpush1.xpose.msra.mxu0 0.0
    %61 = vmatprep.subr.mxu0 0.0
    %62 = vmatpush1.xpose.msra.mxu0 0.0
    %63 = vmatprep.subr.mxu0 0.0
    %64 = vmatpush1.xpose.msra.mxu0 0.0
    %65 = vmatprep.subr.mxu0 0.0
    %66 = vmatpush1.xpose.msra.mxu0 0.0
    %67 = vmatprep.subr.mxu0 0.0
    %68 = vmatpush1.xpose.msra.mxu0 %v37
    %69 = vmatprep.subr.mxu0 0.0
    %70 = vmatpush1.xpose.msra.mxu0 %v34
    %71 = vmatprep.subr.mxu0 0.0
    %72 = vmatpush2.xpose.msra.mxu0 0.0
    %73 = vmatprep.subr.mxu0 0.0
    %74 = vmatpush2.xpose.msra.mxu0 0.0
    %75 = vmatprep.subr.mxu0 0.0
    %76 = vmatpush2.xpose.msra.mxu0 0.0
    %77 = vmatprep.subr.mxu0 0.0
    %78 = vmatpush2.xpose.msra.mxu0 0.0
    %79 = vmatprep.subr.mxu0 0.0
    %80 = vmatpush2.xpose.msra.mxu0 0.0
    %81 = vmatprep.subr.mxu0 0.0
    %82 = vmatpush2.xpose.msra.mxu0 0.0
    %83 = vmatprep.subr.mxu0 0.0
    %84 = vmatpush2.xpose.msra.mxu0 0.0
    %85 = vmatprep.subr.mxu0 0.0
    %86 = vmatpush2.xpose.msra.mxu0 0.0
    %87 = vmatprep.subr.mxu0 0.0
    %88 = vmatpush2.xpose.msra.mxu0 0.0
    %89 = vmatprep.subr.mxu0 0.0
    %90 = vmatpush2.xpose.msra.mxu0 0.0
    %91 = vmatprep.subr.mxu0 0.0
    %92 = vmatpush2.xpose.msra.mxu0 0.0
    %93 = vmatprep.subr.mxu0 0.0
    %94 = vmatpush2.xpose.msra.mxu0 0.0
    %95 = vmatprep.subr.mxu0 0.0
    %96 = vmatpush2.xpose.msra.mxu0 0.0
    %97 = vmatprep.subr.mxu0 0.0
    %98 = vmatpush2.xpose.msra.mxu0 0.0
    %99 = vmatprep.subr.mxu0 0.0
    %100 = vmatpush2.xpose.msra.mxu0 0.0
    %101 = vmatprep.subr.mxu0 0.0
    %102 = vmatpush2.xpose.msra.mxu0 0.0
    %103 = vmatprep.mubr.f32.mxu0 0.0
    %104 = vmatmul.mubr.f32.gmra.mxu0 %v31
    %v105 = vpop.f32.mrf.mxu0
    %v106 = vadd.f32 0.0, %v105
    %v107 = vpop.f32.mrf.mxu0
    %108 = vdwg.mxu0
    %vm109 = vcmask 73728
    %110 = vst.msk [vmem:[#allocation5] sm:$0x1] %vm109, %v106
    // Predicated region
    $region14: #{tpu_custom_call.1} parent=1 // pred_check
      _
    $region15: #{tpu_custom_call.1} parent=1 // pred_check_branch
      %112 = sbr.rel (0) target = $region17
    $region16: #{tpu_custom_call.1} parent=1 // pred_region
      %s114 = ssub.s32 16, 16
      %115 = vsyncadd [#allocation4], %s114
      %s117 = sshll.u32 [#allocation5], 4
      %s118 = int_to_ptr.vmem [resolvable:$true] %s117
      %120 = dma.vmem_to_hbm [thread:$0]  %s118, 16, %s2, [#allocation4]
    $region17: #{tpu_custom_call.1} parent=1 // pred_fallthru
      _
    // Predicated region
    $region18: #{tpu_custom_call.1} parent=1 // pred_check
      _
    $region19: #{tpu_custom_call.1} parent=1 // pred_check_branch
      %122 = sbr.rel (0) target = $region21
    $region20: #{tpu_custom_call.1} parent=1 // pred_region
      %123 = dma.done [#allocation4], 16
    $region21: #{tpu_custom_call.1} parent=1 // pred_fallthru
      _
    %124 = vsyncpa [#allocation3], 1
    %125 = vsyncpa [#allocation4], 1

</llo_original>
